<compile_context>
chip_gen: v6e
topology: v6e:2x2x1
jax: 0.10.0
libtpu: 0.0.40
codegen_flags: <defaults>
</compile_context>

<pallas_src>
import jax
import jax.numpy as jnp
from jax.scipy.linalg import block_diag
from jax.experimental import pallas as pl
from jax.experimental.pallas import tpu as pltpu

R = 4  # row-fold factor: 4 input rows packed per lane-dense kernel row


def _round_up(n, m):
    return ((n + m - 1) // m) * m


def net_kernel(x_ref, w1_ref, bias_ref, w2_ref, b2_ref, o_ref):
    # fc1 (BN folded), block-diagonal over R packed rows: [TB,128] @ [128,256]
    h = jnp.dot(x_ref[...], w1_ref[...], preferred_element_type=jnp.float32)
    # fused bias + relu (one VPU pass); dropout(p=0.35) is identity in eval mode
    h = jnp.maximum(h + bias_ref[...], 0.0)
    # fc2 as a block-diagonal [256,4] matmul -> one scalar per packed row
    z = jnp.dot(h, w2_ref[...], preferred_element_type=jnp.float32) + b2_ref[0]
    # sigmoid lowers exp/reciprocal onto the EUP
    o_ref[...] = jax.nn.sigmoid(z)


def prepare_params(params, eps=1e-5):
    """One-time: fold eval-mode BatchNorm1d into fc1, then build R-row
    block-diagonal weights so x / h / z are lane-dense (K=128, N=256)."""
    w1, b1, gamma, beta, run_mean, run_var, w2, b2 = params
    scale = gamma / jnp.sqrt(run_var + eps)                     # [H]
    shift = beta - run_mean * scale                             # [H]
    w1_folded = (w1 * scale[None, :]).astype(jnp.float32)       # [D, H]
    bias_folded = (b1 * scale + shift).astype(jnp.float32)      # [H]
    # R-row block-diagonal repack: x is reshaped to (B/R, R*D) in the wrapper;
    # these weights apply fc1/fc2 independently to each of the R packed rows.
    w1_bd = block_diag(*([w1_folded] * R))                      # [R*D, R*H]
    bias_bd = jnp.tile(bias_folded, R).reshape(1, -1)           # [1, R*H]
    w2_bd = block_diag(*([w2.astype(jnp.float32)] * R))         # [R*H, R]
    b2_scalar = b2.reshape(1).astype(jnp.float32)               # [1] SMEM scalar
    # TODO(synk): optional bf16 weights + bf16 x (with f32 accumulation) would
    # further cut MXU cost and x HBM traffic but needs looser tolerances.
    return w1_bd, bias_bd, w2_bd, b2_scalar


def net_forward(x, prepared, tile_rows=8192):
    """x: [B, D_in] float32, prepared = prepare_params(params)."""
    w1_bd, bias_bd, w2_bd, b2s = prepared
    B, D = x.shape
    K, N = w1_bd.shape            # (R*D, R*H) = (128, 256)
    assert K == R * D

    # Pad only to a multiple of R (<= 3 rows; a no-op when B % R == 0) so the
    # lane-dense reshape below is a free, layout-preserving reshape.
    B_r = _round_up(B, R)
    if B_r != B:
        x = jnp.pad(x, ((0, B_r - B), (0, 0)))
    xf = x.reshape(B_r // R, K)   # [BF, 128], row-major -> no data movement
    BF = xf.shape[0]

    # Folded-row tile: large (amortizes ~0.35us per-grid-step overhead),
    # multiple of 8 sublanes, and capped so the grid exposes >= 2 blocks for
    # v7x's two TensorCores when the batch is large enough.
    tbf_max = max(8, (tile_rows // R // 8) * 8)
    if BF <= tbf_max:
        tbf = _round_up(pl.cdiv(BF, 2), 8)
        if tbf >= BF:
            tbf = BF              # small batch: single full-extent block
    else:
        tbf = tbf_max
    num_tiles = pl.cdiv(BF, tbf)  # partial edge block handled by Pallas masking

    out = pl.pallas_call(
        net_kernel,
        out_shape=jax.ShapeDtypeStruct((BF, R), jnp.float32),
        grid=(num_tiles,),
        in_specs=[
            pl.BlockSpec((tbf, K), lambda i: (i, 0)),    # x: tiled over batch
            pl.BlockSpec((K, N), lambda i: (0, 0)),      # fc1 block-diag (resident)
            pl.BlockSpec((1, N), lambda i: (0, 0)),      # folded bias (resident)
            pl.BlockSpec((N, R), lambda i: (0, 0)),      # fc2 block-diag (resident)
            pl.BlockSpec(memory_space=pltpu.MemorySpace.SMEM),  # b2 scalar
        ],
        out_specs=pl.BlockSpec((tbf, R), lambda i: (i, 0)),
        compiler_params=pltpu.CompilerParams(
            dimension_semantics=("parallel",),           # megacore sharding
            vmem_limit_bytes=32 * 1024 * 1024,
        ),
    )(xf, w1_bd, bias_bd, w2_bd, b2s)
    # [BF, R] -> [B_r, 1]; padded / edge-block rows beyond B are discarded.
    return out.reshape(B_r, 1)[:B]


def init_params(key, input_size, hidden=64):
    """Deterministic init mirroring PyTorch defaults (uniform +-1/sqrt(fan_in))."""
    k1, k2, k3, k4 = jax.random.split(key, 4)
    bound1 = 1.0 / (input_size ** 0.5)
    w1 = jax.random.uniform(k1, (input_size, hidden), jnp.float32, -bound1, bound1)
    b1 = jax.random.uniform(k2, (hidden,), jnp.float32, -bound1, bound1)
    bound2 = 1.0 / (hidden ** 0.5)
    w2 = jax.random.uniform(k3, (hidden, 1), jnp.float32, -bound2, bound2)
    b2 = jax.random.uniform(k4, (1,), jnp.float32, -bound2, bound2)
    # BatchNorm1d defaults: gamma=1, beta=0, running_mean=0, running_var=1
    gamma = jnp.ones((hidden,), jnp.float32)
    beta = jnp.zeros((hidden,), jnp.float32)
    run_mean = jnp.zeros((hidden,), jnp.float32)
    run_var = jnp.ones((hidden,), jnp.float32)
    return (w1, b1, gamma, beta, run_mean, run_var, w2, b2)


def reference_forward(x, params):
    """Pure-JAX reference for correctness check (eval-mode semantics)."""
    w1, b1, gamma, beta, run_mean, run_var, w2, b2 = params
    eps = 1e-5
    h = x @ w1 + b1
    h = (h - run_mean) / jnp.sqrt(run_var + eps) * gamma + beta
    h = jnp.maximum(h, 0.0)
    z = h @ w2 + b2
    return jax.nn.sigmoid(z)


if __name__ == "__main__":
    D_in = 32
    key = jax.random.PRNGKey(0)
    kx, kp, kx2, kx3 = jax.random.split(key, 4)
    params = init_params(kp, D_in)
    prepared = prepare_params(params)   # one-time BN fold + block-diag repack

    # Small-shape check (single full-extent block, BF=2).
    B = 8
    x = jax.random.normal(kx, (B, D_in), jnp.float32)
    out = jax.block_until_ready(net_forward(x, prepared))
    ref = reference_forward(x, params)
    assert out.shape == (B, 1), out.shape
    assert jnp.allclose(out, ref, atol=1e-5, rtol=1e-5)

    # Larger batch, B % 4 == 0 (no pad), two grid tiles with a partial edge block.
    B2 = 1000
    x2 = jax.random.normal(kx2, (B2, D_in), jnp.float32)
    out2 = jax.block_until_ready(net_forward(x2, prepared))
    ref2 = reference_forward(x2, params)
    assert out2.shape == (B2, 1), out2.shape
    assert jnp.allclose(out2, ref2, atol=1e-5, rtol=1e-5)

    # Ragged batch (B % 4 != 0): exercises the tiny R-pad + edge-block masking.
    B3 = 1003
    x3 = jax.random.normal(kx3, (B3, D_in), jnp.float32)
    out3 = jax.block_until_ready(net_forward(x3, prepared))
    ref3 = reference_forward(x3, params)
    assert out3.shape == (B3, 1), out3.shape
    assert jnp.allclose(out3, ref3, atol=1e-5, rtol=1e-5)

    print("KERNEL_OK")
</pallas_src>

<mosaic_0001>
module attributes {stable_mosaic.version = 11 : i64} {
  func.func @net_kernel(%arg0: i32, %arg1: memref<2x128xf32, #tpu.memory_space<vmem>>, %arg2: memref<128x256xf32, #tpu.memory_space<vmem>>, %arg3: memref<1x256xf32, #tpu.memory_space<vmem>>, %arg4: memref<256x4xf32, #tpu.memory_space<vmem>>, %arg5: memref<1xf32, #tpu.memory_space<smem>>, %arg6: memref<2x4xf32, #tpu.memory_space<vmem>>) attributes {dimension_semantics = [#tpu.dimension_semantics<parallel>], iteration_bounds = array<i64: 1>, scalar_prefetch = 0 : i64, scratch_operands = 0 : i64, tpu.core_type = #tpu.core_type<tc>, window_params = [{transform_indices = @transform_0, window_bounds = array<i64: 2, 128>}, {pipeline_mode = #tpu.pipeline_mode<synchronous>, transform_indices = @transform_1, window_bounds = array<i64: 128, 256>}, {pipeline_mode = #tpu.pipeline_mode<synchronous>, transform_indices = @transform_2, window_bounds = array<i64: 1, 256>}, {pipeline_mode = #tpu.pipeline_mode<synchronous>, transform_indices = @transform_3, window_bounds = array<i64: 256, 4>}, {transform_indices = @transform_4, window_bounds = array<i64: 1>}, {transform_indices = @transform_5, window_bounds = array<i64: 2, 4>}]} {
    %c0 = arith.constant 0 : index
    %c0_0 = arith.constant 0 : index
    %0 = vector.load %arg1[%c0, %c0_0] : memref<2x128xf32, #tpu.memory_space<vmem>>, vector<2x128xf32>
    %c0_1 = arith.constant 0 : index
    %c0_2 = arith.constant 0 : index
    %1 = vector.load %arg2[%c0_1, %c0_2] : memref<128x256xf32, #tpu.memory_space<vmem>>, vector<128x256xf32>
    %cst = arith.constant dense<0.000000e+00> : vector<2x256xf32>
    %2 = tpu.matmul %0, %1, %cst {dimension_numbers = #tpu.dot_dimension_numbers<[1], [0], [0], [1], [0, 0, 1, 1], [], []>} : vector<2x128xf32>, vector<128x256xf32>, vector<2x256xf32> -> vector<2x256xf32>
    %c0_3 = arith.constant 0 : index
    %c0_4 = arith.constant 0 : index
    %3 = vector.load %arg3[%c0_3, %c0_4] : memref<1x256xf32, #tpu.memory_space<vmem>>, vector<1x256xf32>
    %4 = vector.broadcast %3 : vector<1x256xf32> to vector<2x256xf32>
    %5 = arith.addf %2, %4 : vector<2x256xf32>
    %cst_5 = arith.constant 0.000000e+00 : f32
    %6 = vector.broadcast %cst_5 : f32 to vector<2x256xf32>
    %7 = arith.maximumf %5, %6 : vector<2x256xf32>
    %c0_6 = arith.constant 0 : index
    %c0_7 = arith.constant 0 : index
    %8 = vector.load %arg4[%c0_6, %c0_7] : memref<256x4xf32, #tpu.memory_space<vmem>>, vector<256x4xf32>
    %cst_8 = arith.constant dense<0.000000e+00> : vector<2x4xf32>
    %9 = tpu.matmul %7, %8, %cst_8 {dimension_numbers = #tpu.dot_dimension_numbers<[1], [0], [0], [1], [0, 0, 1, 1], [], []>} : vector<2x256xf32>, vector<256x4xf32>, vector<2x4xf32> -> vector<2x4xf32>
    %c0_9 = arith.constant 0 : index
    %10 = memref.load %arg5[%c0_9] : memref<1xf32, #tpu.memory_space<smem>>
    %11 = vector.broadcast %10 : f32 to vector<2x4xf32>
    %12 = arith.addf %9, %11 : vector<2x4xf32>
    %13 = arith.negf %12 : vector<2x4xf32>
    %14 = math.exp %13 : vector<2x4xf32>
    %cst_10 = arith.constant 1.000000e+00 : f32
    %15 = vector.broadcast %cst_10 : f32 to vector<2x4xf32>
    %16 = arith.addf %15, %14 : vector<2x4xf32>
    %17 = arith.divf %15, %16 : vector<2x4xf32>
    %c0_11 = arith.constant 0 : index
    %c0_12 = arith.constant 0 : index
    %18 = vector.load %arg6[%c0_11, %c0_12] : memref<2x4xf32, #tpu.memory_space<vmem>>, vector<2x4xf32>
    tpu.vector_store %arg6[%c0_11, %c0_12], %17 {strides = array<i32>} : memref<2x4xf32, #tpu.memory_space<vmem>>, vector<2x4xf32>,
    return
  }
  func.func @transform_0(%arg0: i32) -> (i32, i32) {
    %c0_i32 = arith.constant 0 : i32
    %c0_i32_0 = arith.constant 0 : i32
    return %arg0, %c0_i32 : i32, i32
  }
  func.func @transform_1(%arg0: i32) -> (i32, i32) {
    %c0_i32 = arith.constant 0 : i32
    %c0_i32_0 = arith.constant 0 : i32
    %c0_i32_1 = arith.constant 0 : i32
    return %c0_i32, %c0_i32_0 : i32, i32
  }
  func.func @transform_2(%arg0: i32) -> (i32, i32) {
    %c0_i32 = arith.constant 0 : i32
    %c0_i32_0 = arith.constant 0 : i32
    %c0_i32_1 = arith.constant 0 : i32
    return %c0_i32, %c0_i32_0 : i32, i32
  }
  func.func @transform_3(%arg0: i32) -> (i32, i32) {
    %c0_i32 = arith.constant 0 : i32
    %c0_i32_0 = arith.constant 0 : i32
    %c0_i32_1 = arith.constant 0 : i32
    return %c0_i32, %c0_i32_0 : i32, i32
  }
  func.func @transform_4(%arg0: i32) -> i32 {
    %c0_i32 = arith.constant 0 : i32
    %c0_i32_0 = arith.constant 0 : i32
    return %c0_i32 : i32
  }
  func.func @transform_5(%arg0: i32) -> (i32, i32) {
    %c0_i32 = arith.constant 0 : i32
    %c0_i32_0 = arith.constant 0 : i32
    return %arg0, %c0_i32 : i32, i32
  }
}

</mosaic_0001>

<llo_original>
// kernel: tpu_custom_call.1
$region0: #{tpu_custom_call.1}
  #allocation0 [shape = 'u32[]', space=smem, size = 0x4, offset = 0x4, fixed_abs, tag = 'smem constant byte address 0x4 - core index']
  #allocation1 [shape = 'u32[144,128]{1,0:T(1,128)}', space=vmem, size = 0x12000, scoped, tag = 'internal scratch']
  #allocation2 [shape = 'f32[1]{0:T(128)S(6)}', space=smem, size = 0x200, scoped, tag = 'scoped memory for tpu_custom_call.1']
  %s0 = inlined_call_operand.vmem [shape: f32[2,128], index: 0, kind: input, shape index: {}]
  %s1 = inlined_call_operand.vmem [shape: f32[128,256], index: 1, kind: input, shape index: {}]
  %s2 = inlined_call_operand.vmem [shape: f32[1,256], index: 2, kind: input, shape index: {}]
  %s3 = inlined_call_operand.vmem [shape: f32[256,4], index: 3, kind: input, shape index: {}]
  %s4 = inlined_call_operand.<no memory space> [shape: f32[1], index: 4, kind: input, shape index: {}]
  %s5 = inlined_call_operand.hbm [shape: f32[2,4], index: 5, kind: output, shape index: {}]
  %s6 = sld [smem:[#allocation0]]
  $region30: #{tpu_custom_call.1} parent=0
    _
  %s8 = ssub.s32 1, %s6
  %s9 = scalar_select 0, %s8, %s6
  %10 = sst [smem:[#allocation2]] %s4
  $region1: #{tpu_custom_call.1} parent=0
    #allocation3 [shape = 'u8[1024]{0}', space=vmem, size = 0x400, scoped, tag = 'output window, operand 0, single buffered']
    #allocation4 [shape = 's32[1]{0}', space=sflag, size = 0x4, scoped, tag = 'scoped memory for tpu_custom_call.1']
    %11 = vsyncpa [#allocation4], 0
    // Predicated region
    $region2: #{tpu_custom_call.1} parent=1 // pred_check
      _
    $region3: #{tpu_custom_call.1} parent=1 // pred_check_branch
      %13 = sbr.rel (0) target = $region5
    $region4: #{tpu_custom_call.1} parent=1 // pred_region
      _
    $region5: #{tpu_custom_call.1} parent=1 // pred_fallthru
      _
    // Predicated region
    $region6: #{tpu_custom_call.1} parent=1 // pred_check
      _
    $region7: #{tpu_custom_call.1} parent=1 // pred_check_branch
      %15 = sbr.rel (0) target = $region9
    $region8: #{tpu_custom_call.1} parent=1 // pred_region
      _
    $region9: #{tpu_custom_call.1} parent=1 // pred_fallthru
      _
    // Predicated region
    $region10: #{tpu_custom_call.1} parent=1 // pred_check
      _
    $region11: #{tpu_custom_call.1} parent=1 // pred_check_branch
      %17 = sbr.rel (0) target = $region13
    $region12: #{tpu_custom_call.1} parent=1 // pred_region
      _
    $region13: #{tpu_custom_call.1} parent=1 // pred_fallthru
      _
    // Predicated region
    $region14: #{tpu_custom_call.1} parent=1 // pred_check
      _
    $region15: #{tpu_custom_call.1} parent=1 // pred_check_branch
      %19 = sbr.rel (0) target = $region17
    $region16: #{tpu_custom_call.1} parent=1 // pred_region
      _
    $region17: #{tpu_custom_call.1} parent=1 // pred_fallthru
      _
    // Predicated region
    $region18: #{tpu_custom_call.1} parent=1 // pred_check
      _
    $region19: #{tpu_custom_call.1} parent=1 // pred_check_branch
      %21 = sbr.rel (0) target = $region21
    $region20: #{tpu_custom_call.1} parent=1 // pred_region
      _
    $region21: #{tpu_custom_call.1} parent=1 // pred_fallthru
      _
    %v22 = vld [vmem:[%s0] sm:$0x3]
    %v23 = vld [vmem:[%s1] sm:$0xff]
    %v24 = vld [vmem:[%s1 + $0x8] sm:$0xff]
    %v25 = vld [vmem:[%s1 + $0x10] sm:$0xff]
    %v26 = vld [vmem:[%s1 + $0x18] sm:$0xff]
    %v27 = vld [vmem:[%s1 + $0x20] sm:$0xff]
    %v28 = vld [vmem:[%s1 + $0x28] sm:$0xff]
    %v29 = vld [vmem:[%s1 + $0x30] sm:$0xff]
    %v30 = vld [vmem:[%s1 + $0x38] sm:$0xff]
    %v31 = vld [vmem:[%s1 + $0x40] sm:$0xff]
    %v32 = vld [vmem:[%s1 + $0x48] sm:$0xff]
    %v33 = vld [vmem:[%s1 + $0x50] sm:$0xff]
    %v34 = vld [vmem:[%s1 + $0x58] sm:$0xff]
    %v35 = vld [vmem:[%s1 + $0x60] sm:$0xff]
    %v36 = vld [vmem:[%s1 + $0x68] sm:$0xff]
    %v37 = vld [vmem:[%s1 + $0x70] sm:$0xff]
    %v38 = vld [vmem:[%s1 + $0x78] sm:$0xff]
    %v39 = vld [vmem:[%s1 + $0x80] sm:$0xff]
    %v40 = vld [vmem:[%s1 + $0x88] sm:$0xff]
    %v41 = vld [vmem:[%s1 + $0x90] sm:$0xff]
    %v42 = vld [vmem:[%s1 + $0x98] sm:$0xff]
    %v43 = vld [vmem:[%s1 + $0xa0] sm:$0xff]
    %v44 = vld [vmem:[%s1 + $0xa8] sm:$0xff]
    %v45 = vld [vmem:[%s1 + $0xb0] sm:$0xff]
    %v46 = vld [vmem:[%s1 + $0xb8] sm:$0xff]
    %v47 = vld [vmem:[%s1 + $0xc0] sm:$0xff]
    %v48 = vld [vmem:[%s1 + $0xc8] sm:$0xff]
    %v49 = vld [vmem:[%s1 + $0xd0] sm:$0xff]
    %v50 = vld [vmem:[%s1 + $0xd8] sm:$0xff]
    %v51 = vld [vmem:[%s1 + $0xe0] sm:$0xff]
    %v52 = vld [vmem:[%s1 + $0xe8] sm:$0xff]
    %v53 = vld [vmem:[%s1 + $0xf0] sm:$0xff]
    %v54 = vld [vmem:[%s1 + $0xf8] sm:$0xff]
    %v55 = vld [vmem:[%s2] sm:$0x3]
    %v57 = vlaneseq
    %v58 = vshrl.u32 %v57, 7
    %v59 = vsub.s32 0, %v58
    %v60 = vrot.slane %v55, %v59
    %v61 = vlaneseq
    %v62 = vshrl.u32 %v61, 7
    %v63 = vsub.s32 1, %v62
    %v64 = vrot.slane %v55, %v63
    %67 = vmatprep.subr.mxu0 %v54
    %68 = vmatpush1.msra.mxu0 %v53
    %69 = vmatprep.subr.mxu0 %v52
    %70 = vmatpush1.msra.mxu0 %v51
    %71 = vmatprep.subr.mxu0 %v50
    %72 = vmatpush1.msra.mxu0 %v49
    %73 = vmatprep.subr.mxu0 %v48
    %74 = vmatpush1.msra.mxu0 %v47
    %75 = vmatprep.subr.mxu0 %v46
    %76 = vmatpush1.msra.mxu0 %v45
    %77 = vmatprep.subr.mxu0 %v44
    %78 = vmatpush1.msra.mxu0 %v43
    %79 = vmatprep.subr.mxu0 %v42
    %80 = vmatpush1.msra.mxu0 %v41
    %81 = vmatprep.subr.mxu0 %v40
    %82 = vmatpush1.msra.mxu0 %v39
    %83 = vmatprep.subr.mxu0 %v38
    %84 = vmatpush1.msra.mxu0 %v37
    %85 = vmatprep.subr.mxu0 %v36
    %86 = vmatpush1.msra.mxu0 %v35
    %87 = vmatprep.subr.mxu0 %v34
    %88 = vmatpush1.msra.mxu0 %v33
    %89 = vmatprep.subr.mxu0 %v32
    %90 = vmatpush1.msra.mxu0 %v31
    %91 = vmatprep.subr.mxu0 %v30
    %92 = vmatpush1.msra.mxu0 %v29
    %93 = vmatprep.subr.mxu0 %v28
    %94 = vmatpush1.msra.mxu0 %v27
    %95 = vmatprep.subr.mxu0 %v26
    %96 = vmatpush1.msra.mxu0 %v25
    %97 = vmatprep.subr.mxu0 %v24
    %98 = vmatpush1.msra.mxu0 %v23
    %99 = vmatprep.subr.mxu0 0.0
    %100 = vmatpush2.msra.mxu0 0.0
    %101 = vmatprep.subr.mxu0 0.0
    %102 = vmatpush2.msra.mxu0 0.0
    %103 = vmatprep.subr.mxu0 0.0
    %104 = vmatpush2.msra.mxu0 0.0
    %105 = vmatprep.subr.mxu0 0.0
    %106 = vmatpush2.msra.mxu0 0.0
    %107 = vmatprep.subr.mxu0 0.0
    %108 = vmatpush2.msra.mxu0 0.0
    %109 = vmatprep.subr.mxu0 0.0
    %110 = vmatpush2.msra.mxu0 0.0
    %111 = vmatprep.subr.mxu0 0.0
    %112 = vmatpush2.msra.mxu0 0.0
    %113 = vmatprep.subr.mxu0 0.0
    %114 = vmatpush2.msra.mxu0 0.0
    %115 = vmatprep.subr.mxu0 0.0
    %116 = vmatpush2.msra.mxu0 0.0
    %117 = vmatprep.subr.mxu0 0.0
    %118 = vmatpush2.msra.mxu0 0.0
    %119 = vmatprep.subr.mxu0 0.0
    %120 = vmatpush2.msra.mxu0 0.0
    %121 = vmatprep.subr.mxu0 0.0
    %122 = vmatpush2.msra.mxu0 0.0
    %123 = vmatprep.subr.mxu0 0.0
    %124 = vmatpush2.msra.mxu0 0.0
    %125 = vmatprep.subr.mxu0 0.0
    %126 = vmatpush2.msra.mxu0 0.0
    %127 = vmatprep.subr.mxu0 0.0
    %128 = vmatpush2.msra.mxu0 0.0
    %129 = vmatprep.subr.mxu0 0.0
    %130 = vmatpush2.msra.mxu0 0.0
    %131 = vmatprep.mubr.f32.mxu0 0.0
    %132 = vmatmul.mubr.f32.gmra.mxu0 %v22
    %v133 = vpop.f32.mrf.mxu0
    %v134 = vadd.f32 %v60, %v133
    %v135 = vpop.f32.mrf.mxu0
    %v136 = vadd.f32 %v64, %v135
    %137 = vdwg.mxu0
    %v138 = vmax.f32 %v134, 0.0
    %v139 = vmax.f32 %v136, 0.0
    %v140 = vld [vmem:[%s3] sm:$0xff]
    %v141 = vld [vmem:[%s3 + $0x8] sm:$0xff]
    %v142 = vld [vmem:[%s3 + $0x10] sm:$0xff]
    %v143 = vld [vmem:[%s3 + $0x18] sm:$0xff]
    %v144 = vld [vmem:[%s3 + $0x20] sm:$0xff]
    %v145 = vld [vmem:[%s3 + $0x28] sm:$0xff]
    %v146 = vld [vmem:[%s3 + $0x30] sm:$0xff]
    %v147 = vld [vmem:[%s3 + $0x38] sm:$0xff]
    %v148 = vld [vmem:[%s3 + $0x40] sm:$0xff]
    %v149 = vld [vmem:[%s3 + $0x48] sm:$0xff]
    %v150 = vld [vmem:[%s3 + $0x50] sm:$0xff]
    %v151 = vld [vmem:[%s3 + $0x58] sm:$0xff]
    %v152 = vld [vmem:[%s3 + $0x60] sm:$0xff]
    %v153 = vld [vmem:[%s3 + $0x68] sm:$0xff]
    %v154 = vld [vmem:[%s3 + $0x70] sm:$0xff]
    %v155 = vld [vmem:[%s3 + $0x78] sm:$0xff]
    %v156 = vld [vmem:[%s3 + $0x80] sm:$0xff]
    %v157 = vld [vmem:[%s3 + $0x88] sm:$0xff]
    %v158 = vld [vmem:[%s3 + $0x90] sm:$0xff]
    %v159 = vld [vmem:[%s3 + $0x98] sm:$0xff]
    %v160 = vld [vmem:[%s3 + $0xa0] sm:$0xff]
    %v161 = vld [vmem:[%s3 + $0xa8] sm:$0xff]
    %v162 = vld [vmem:[%s3 + $0xb0] sm:$0xff]
    %v163 = vld [vmem:[%s3 + $0xb8] sm:$0xff]
    %v164 = vld [vmem:[%s3 + $0xc0] sm:$0xff]
    %v165 = vld [vmem:[%s3 + $0xc8] sm:$0xff]
    %v166 = vld [vmem:[%s3 + $0xd0] sm:$0xff]
    %v167 = vld [vmem:[%s3 + $0xd8] sm:$0xff]
    %v168 = vld [vmem:[%s3 + $0xe0] sm:$0xff]
    %v169 = vld [vmem:[%s3 + $0xe8] sm:$0xff]
    %v170 = vld [vmem:[%s3 + $0xf0] sm:$0xff]
    %v171 = vld [vmem:[%s3 + $0xf8] sm:$0xff]
    %s172 = sld [smem:[#allocation2]]
    %v173 = vstv %s172
    %174 = vmatprep.subr.mxu0 0.0
    %175 = vmatpush1.msra.mxu0 %v155
    %176 = vmatprep.subr.mxu0 0.0
    %177 = vmatpush1.msra.mxu0 %v154
    %178 = vmatprep.subr.mxu0 0.0
    %179 = vmatpush1.msra.mxu0 %v153
    %180 = vmatprep.subr.mxu0 0.0
    %181 = vmatpush1.msra.mxu0 %v152
    %182 = vmatprep.subr.mxu0 0.0
    %183 = vmatpush1.msra.mxu0 %v151
    %184 = vmatprep.subr.mxu0 0.0
    %185 = vmatpush1.msra.mxu0 %v150
    %186 = vmatprep.subr.mxu0 0.0
    %187 = vmatpush1.msra.mxu0 %v149
    %188 = vmatprep.subr.mxu0 0.0
    %189 = vmatpush1.msra.mxu0 %v148
    %190 = vmatprep.subr.mxu0 0.0
    %191 = vmatpush1.msra.mxu0 %v147
    %192 = vmatprep.subr.mxu0 0.0
    %193 = vmatpush1.msra.mxu0 %v146
    %194 = vmatprep.subr.mxu0 0.0
    %195 = vmatpush1.msra.mxu0 %v145
    %196 = vmatprep.subr.mxu0 0.0
    %197 = vmatpush1.msra.mxu0 %v144
    %198 = vmatprep.subr.mxu0 0.0
    %199 = vmatpush1.msra.mxu0 %v143
    %200 = vmatprep.subr.mxu0 0.0
    %201 = vmatpush1.msra.mxu0 %v142
    %202 = vmatprep.subr.mxu0 0.0
    %203 = vmatpush1.msra.mxu0 %v141
    %204 = vmatprep.subr.mxu0 0.0
    %205 = vmatpush1.msra.mxu0 %v140
    %206 = vmatprep.subr.mxu0 0.0
    %207 = vmatpush2.msra.mxu0 %v171
    %208 = vmatprep.subr.mxu0 0.0
    %209 = vmatpush2.msra.mxu0 %v170
    %210 = vmatprep.subr.mxu0 0.0
    %211 = vmatpush2.msra.mxu0 %v169
    %212 = vmatprep.subr.mxu0 0.0
    %213 = vmatpush2.msra.mxu0 %v168
    %214 = vmatprep.subr.mxu0 0.0
    %215 = vmatpush2.msra.mxu0 %v167
    %216 = vmatprep.subr.mxu0 0.0
    %217 = vmatpush2.msra.mxu0 %v166
    %218 = vmatprep.subr.mxu0 0.0
    %219 = vmatpush2.msra.mxu0 %v165
    %220 = vmatprep.subr.mxu0 0.0
    %221 = vmatpush2.msra.mxu0 %v164
    %222 = vmatprep.subr.mxu0 0.0
    %223 = vmatpush2.msra.mxu0 %v163
    %224 = vmatprep.subr.mxu0 0.0
    %225 = vmatpush2.msra.mxu0 %v162
    %226 = vmatprep.subr.mxu0 0.0
    %227 = vmatpush2.msra.mxu0 %v161
    %228 = vmatprep.subr.mxu0 0.0
    %229 = vmatpush2.msra.mxu0 %v160
    %230 = vmatprep.subr.mxu0 0.0
    %231 = vmatpush2.msra.mxu0 %v159
    %232 = vmatprep.subr.mxu0 0.0
    %233 = vmatpush2.msra.mxu0 %v158
    %234 = vmatprep.subr.mxu0 0.0
    %235 = vmatpush2.msra.mxu0 %v157
    %236 = vmatprep.subr.mxu0 0.0
    %237 = vmatpush2.msra.mxu0 %v156
    %238 = vmatprep.mubr.f32.mxu0 %v139
    %239 = vmatmul.mubr.f32.gmra.mxu0 %v138
    %v240 = vpop.f32.mrf.mxu0
    %v241 = vadd.f32 %v173, %v240
    %v242 = vpop.f32.mrf.mxu0
    %243 = vdwg.mxu0
    %v244 = vxor.u32 %v241, 2147483648
    %v245 = vmul.f32 %v244, 1.442695
    %v246 = vpow.pop %v245
    %v247 = vadd.f32 %v246, 1.0
    %v248 = vrcp.pop %v247
    %v249 = vmul.f32 1.0, %v248
    %vm250 = vcmask 25600
    %251 = vst.msk [vmem:[#allocation3] sm:$0x3] %vm250, %v249
    // Predicated region
    $region22: #{tpu_custom_call.1} parent=1 // pred_check
      _
    $region23: #{tpu_custom_call.1} parent=1 // pred_check_branch
      %253 = sbr.rel (0) target = $region25
    $region24: #{tpu_custom_call.1} parent=1 // pred_region
      %s255 = ssub.s32 32, 32
      %256 = vsyncadd [#allocation4], %s255
      %s258 = sshll.u32 [#allocation3], 4
      %s259 = int_to_ptr.vmem [resolvable:$true] %s258
      %261 = dma.vmem_to_hbm [thread:$0]  %s259, 32, %s5, [#allocation4]
    $region25: #{tpu_custom_call.1} parent=1 // pred_fallthru
      _
    // Predicated region
    $region26: #{tpu_custom_call.1} parent=1 // pred_check
      _
    $region27: #{tpu_custom_call.1} parent=1 // pred_check_branch
      %263 = sbr.rel (0) target = $region29
    $region28: #{tpu_custom_call.1} parent=1 // pred_region
      %264 = dma.done [#allocation4], 32
    $region29: #{tpu_custom_call.1} parent=1 // pred_fallthru
      _
    %265 = vsyncpa [#allocation4], 1

</llo_original>
